<compile_context>
chip_gen: v6e
topology: v6e:2x2x1
jax: 0.10.0
libtpu: 0.0.40
codegen_flags: <defaults>
</compile_context>

<pallas_src>
import math
import functools

import jax
import jax.numpy as jnp
from jax.experimental import pallas as pl
from jax.experimental.pallas import tpu as pltpu


LANES = 128  # TPU lane width; pad feature dims to this for lane-dense stores.


def _round_up(x, m):
    return ((x + m - 1) // m) * m


def mlp_kernel(x_ref, w1_ref, b1_ref, w2_ref, b2_ref, o_ref):
    # x_ref : (TILE_N, D_in)       bf16
    # w1_ref: (D_in, H_pad)        bf16      b1_ref: (1, H_pad)  f32
    # w2_ref: (H_pad, O_pad)       bf16      b2_ref: (1, O_pad)  f32 (padded cols = -1e30)
    # o_ref : (TILE_N, O_pad)      f32
    x = x_ref[...]

    # layer_input: x @ W1 + b1  (MXU bf16 operands, f32 accumulate)
    h = jnp.dot(x, w1_ref[...], preferred_element_type=jnp.float32) + b1_ref[...]

    # dropout (eval mode -> identity), then ReLU in f32
    h = jnp.maximum(h, 0.0)

    # layer_hidden: h @ W2 + b2
    logits = (
        jnp.dot(h.astype(w2_ref.dtype), w2_ref[...],
                preferred_element_type=jnp.float32)
        + b2_ref[...]
    )

    # softmax over the feature axis (padded lanes carry -1e30 -> exp ≈ 0)
    m = jnp.max(logits, axis=-1, keepdims=True)
    e = jnp.exp(logits - m)
    s = jnp.sum(e, axis=-1, keepdims=True)
    o_ref[...] = e * pl.reciprocal(s, approx=True)


def prepare_mlp_params(w1, b1, w2, b2):
    """One-time weight preparation (transpose + zero-pad + bf16 cast).

    PyTorch convention in:  w1: (dim_hidden, dim_in), b1: (dim_hidden,)
                            w2: (dim_out, dim_hidden), b2: (dim_out,)
    Returns kernel-layout params and (dim_in, dim_hidden, dim_out).
    """
    dim_hidden, dim_in = w1.shape
    dim_out = w2.shape[0]
    h_pad = _round_up(dim_hidden, LANES)
    o_pad = _round_up(dim_out, LANES)

    # w1^T padded to (dim_in, h_pad), bf16 operand for the MXU.
    w1t = jnp.zeros((dim_in, h_pad), jnp.float32)
    w1t = w1t.at[:, :dim_hidden].set(jnp.asarray(w1, jnp.float32).T)
    w1t = w1t.astype(jnp.bfloat16)

    b1r = jnp.zeros((1, h_pad), jnp.float32)
    b1r = b1r.at[0, :dim_hidden].set(jnp.asarray(b1, jnp.float32))

    # w2^T padded to (h_pad, o_pad), bf16.
    w2t = jnp.zeros((h_pad, o_pad), jnp.float32)
    w2t = w2t.at[:dim_hidden, :dim_out].set(jnp.asarray(w2, jnp.float32).T)
    w2t = w2t.astype(jnp.bfloat16)

    # Padded bias columns get a large negative value so padded logits vanish
    # from the softmax (exp -> 0); real columns get the true bias.
    b2r = jnp.full((1, o_pad), -1e30, jnp.float32)
    b2r = b2r.at[0, :dim_out].set(jnp.asarray(b2, jnp.float32))

    return (w1t, b1r, w2t, b2r), (dim_in, dim_hidden, dim_out)


@functools.partial(jax.jit, static_argnames=("dims",))
def mlp_forward(x, params, dims):
    """x: (N, C, H, W) float-like.  params from prepare_mlp_params."""
    w1t, b1r, w2t, b2r = params
    dim_in, _, dim_out = dims
    h_pad = w1t.shape[1]
    o_pad = w2t.shape[1]

    n = x.shape[0]
    # flatten exactly like x.view(-1, C*H*W); bf16 operand for the MXU.
    x2d = x.reshape(n, dim_in).astype(jnp.bfloat16)

    # Batch tile: multiple of 8 (f32 sublane), 256 for large batches
    # (also a multiple of 128 -> no padded MXU M passes on v5e).
    tile_n = min(256, _round_up(n, 8))
    n_pad = _round_up(n, tile_n)
    if n_pad != n:
        x2d = jnp.pad(x2d, ((0, n_pad - n), (0, 0)))
    grid = (n_pad // tile_n,)

    # VMEM budget: double-buffered x/out tiles + resident weights (+2x slack),
    # clamped so it stays within v7x's 64 MiB physical / 32 MiB scoped default.
    vmem_bytes = (
        2 * tile_n * dim_in * 2            # x tile, bf16, double-buffered
        + dim_in * h_pad * 2               # w1 (resident)
        + h_pad * o_pad * 2                # w2 (resident)
        + (h_pad + o_pad) * 4              # biases
        + 2 * tile_n * o_pad * 4           # out tile, f32, double-buffered
    )
    vmem_limit = int(min(max(2 * vmem_bytes, 4 << 20), 32 << 20))

    cost = pl.CostEstimate(
        flops=2 * n_pad * (dim_in * h_pad + h_pad * o_pad),
        transcendentals=n_pad * o_pad,
        bytes_accessed=(
            n_pad * dim_in * 2
            + dim_in * h_pad * 2 + h_pad * o_pad * 2 + (h_pad + o_pad) * 4
            + n_pad * o_pad * 4
        ),
    )

    out = pl.pallas_call(
        mlp_kernel,
        out_shape=jax.ShapeDtypeStruct((n_pad, o_pad), jnp.float32),
        grid=grid,
        in_specs=[
            pl.BlockSpec((tile_n, dim_in), lambda i: (i, 0)),  # x tile (pipelined)
            pl.BlockSpec((dim_in, h_pad), lambda i: (0, 0)),   # w1 (resident)
            pl.BlockSpec((1, h_pad), lambda i: (0, 0)),        # b1
            pl.BlockSpec((h_pad, o_pad), lambda i: (0, 0)),    # w2 (resident)
            pl.BlockSpec((1, o_pad), lambda i: (0, 0)),        # b2
        ],
        out_specs=pl.BlockSpec((tile_n, o_pad), lambda i: (i, 0)),
        compiler_params=pltpu.CompilerParams(
            dimension_semantics=("parallel",),
            vmem_limit_bytes=vmem_limit,
        ),
        cost_estimate=cost,
    )(x2d, w1t, b1r, w2t, b2r)

    # Drop batch padding and padded output lanes.
    return out[:n, :dim_out]


def init_linear_params(key, fan_in, fan_out):
    """Deterministic init matching nn.Linear's U(-1/sqrt(fan_in), 1/sqrt(fan_in))."""
    kw, kb = jax.random.split(key)
    bound = 1.0 / math.sqrt(fan_in)
    w = jax.random.uniform(kw, (fan_out, fan_in), jnp.float32, -bound, bound)
    b = jax.random.uniform(kb, (fan_out,), jnp.float32, -bound, bound)
    return w, b


if __name__ == "__main__":
    # Small shapes: batch=2, channels=4, spatial=16x16 -> dim_in = 4*16*16 = 1024
    batch, channels, height, width = 2, 4, 16, 16
    dim_in = channels * height * width
    dim_hidden = 32
    dim_out = 10

    key = jax.random.PRNGKey(0)
    kx, k1, k2 = jax.random.split(key, 3)

    x = jax.random.normal(kx, (batch, channels, height, width), jnp.float32)
    w1, b1 = init_linear_params(k1, dim_in, dim_hidden)
    w2, b2 = init_linear_params(k2, dim_hidden, dim_out)

    params, dims = prepare_mlp_params(w1, b1, w2, b2)
    out = mlp_forward(x, params, dims)
    out = jax.block_until_ready(out)

    # sanity vs pure-JAX f32 reference (bf16 matmul operands + approx reciprocal
    # -> loose-ish tolerance)
    x2d = x.reshape(batch, dim_in)
    ref = jax.nn.softmax(jnp.maximum(x2d @ w1.T + b1, 0.0) @ w2.T + b2, axis=1)

    assert out.shape == (batch, dim_out)
    assert jnp.allclose(jnp.sum(out, axis=1), 1.0, atol=1e-2)
    assert jnp.allclose(out, ref, atol=2e-2)

    print("KERNEL_OK")
</pallas_src>

<mosaic_0001>
module attributes {stable_mosaic.version = 11 : i64} {
  func.func @mlp_kernel(%arg0: i32, %arg1: memref<8x1024xbf16, #tpu.memory_space<vmem>>, %arg2: memref<1024x128xbf16, #tpu.memory_space<vmem>>, %arg3: memref<1x128xf32, #tpu.memory_space<vmem>>, %arg4: memref<128x128xbf16, #tpu.memory_space<vmem>>, %arg5: memref<1x128xf32, #tpu.memory_space<vmem>>, %arg6: memref<8x128xf32, #tpu.memory_space<vmem>>) attributes {dimension_semantics = [#tpu.dimension_semantics<parallel>], iteration_bounds = array<i64: 1>, scalar_prefetch = 0 : i64, scratch_operands = 0 : i64, tpu.core_type = #tpu.core_type<tc>, window_params = [{transform_indices = @transform_0, window_bounds = array<i64: 8, 1024>}, {pipeline_mode = #tpu.pipeline_mode<synchronous>, transform_indices = @transform_1, window_bounds = array<i64: 1024, 128>}, {pipeline_mode = #tpu.pipeline_mode<synchronous>, transform_indices = @transform_2, window_bounds = array<i64: 1, 128>}, {pipeline_mode = #tpu.pipeline_mode<synchronous>, transform_indices = @transform_3, window_bounds = array<i64: 128, 128>}, {pipeline_mode = #tpu.pipeline_mode<synchronous>, transform_indices = @transform_4, window_bounds = array<i64: 1, 128>}, {transform_indices = @transform_5, window_bounds = array<i64: 8, 128>}]} {
    %c0 = arith.constant 0 : index
    %c0_0 = arith.constant 0 : index
    %0 = vector.load %arg1[%c0, %c0_0] : memref<8x1024xbf16, #tpu.memory_space<vmem>>, vector<8x1024xbf16>
    %c0_1 = arith.constant 0 : index
    %c0_2 = arith.constant 0 : index
    %1 = vector.load %arg2[%c0_1, %c0_2] : memref<1024x128xbf16, #tpu.memory_space<vmem>>, vector<1024x128xbf16>
    %cst = arith.constant dense<0.000000e+00> : vector<8x128xf32>
    %2 = tpu.matmul %0, %1, %cst {dimension_numbers = #tpu.dot_dimension_numbers<[1], [0], [0], [1], [0, 0, 1, 1], [], []>} : vector<8x1024xbf16>, vector<1024x128xbf16>, vector<8x128xf32> -> vector<8x128xf32>
    %c0_3 = arith.constant 0 : index
    %c0_4 = arith.constant 0 : index
    %3 = vector.load %arg3[%c0_3, %c0_4] : memref<1x128xf32, #tpu.memory_space<vmem>>, vector<1x128xf32>
    %4 = vector.broadcast %3 : vector<1x128xf32> to vector<8x128xf32>
    %5 = arith.addf %2, %4 : vector<8x128xf32>
    %cst_5 = arith.constant 0.000000e+00 : f32
    %6 = vector.broadcast %cst_5 : f32 to vector<8x128xf32>
    %7 = arith.maximumf %5, %6 : vector<8x128xf32>
    %8 = arith.truncf %7 : vector<8x128xf32> to vector<8x128xbf16>
    %c0_6 = arith.constant 0 : index
    %c0_7 = arith.constant 0 : index
    %9 = vector.load %arg4[%c0_6, %c0_7] : memref<128x128xbf16, #tpu.memory_space<vmem>>, vector<128x128xbf16>
    %cst_8 = arith.constant dense<0.000000e+00> : vector<8x128xf32>
    %10 = tpu.matmul %8, %9, %cst_8 {dimension_numbers = #tpu.dot_dimension_numbers<[1], [0], [0], [1], [0, 0, 1, 1], [], []>} : vector<8x128xbf16>, vector<128x128xbf16>, vector<8x128xf32> -> vector<8x128xf32>
    %c0_9 = arith.constant 0 : index
    %c0_10 = arith.constant 0 : index
    %11 = vector.load %arg5[%c0_9, %c0_10] : memref<1x128xf32, #tpu.memory_space<vmem>>, vector<1x128xf32>
    %12 = vector.broadcast %11 : vector<1x128xf32> to vector<8x128xf32>
    %13 = arith.addf %10, %12 : vector<8x128xf32>
    %cst_11 = arith.constant dense<0xFF800000> : vector<8xf32>
    %14 = vector.multi_reduction <maximumf>, %13, %cst_11 [1] : vector<8x128xf32> to vector<8xf32>
    %15 = vector.shape_cast %14 : vector<8xf32> to vector<8x1xf32>
    %16 = vector.broadcast %15 : vector<8x1xf32> to vector<8x128xf32>
    %17 = arith.subf %13, %16 : vector<8x128xf32>
    %18 = math.exp %17 : vector<8x128xf32>
    %cst_12 = arith.constant dense<0.000000e+00> : vector<8xf32>
    %19 = vector.multi_reduction <add>, %18, %cst_12 [1] : vector<8x128xf32> to vector<8xf32>
    %20 = vector.shape_cast %19 : vector<8xf32> to vector<8x1xf32>
    %21 = tpu.reciprocal %20 {approx = true} : vector<8x1xf32> -> vector<8x1xf32>
    %22 = vector.broadcast %21 : vector<8x1xf32> to vector<8x128xf32>
    %23 = arith.mulf %18, %22 : vector<8x128xf32>
    %c0_13 = arith.constant 0 : index
    %c0_14 = arith.constant 0 : index
    %24 = vector.load %arg6[%c0_13, %c0_14] : memref<8x128xf32, #tpu.memory_space<vmem>>, vector<8x128xf32>
    tpu.vector_store %arg6[%c0_13, %c0_14], %23 {strides = array<i32>} : memref<8x128xf32, #tpu.memory_space<vmem>>, vector<8x128xf32>,
    return
  }
  func.func @transform_0(%arg0: i32) -> (i32, i32) {
    %c0_i32 = arith.constant 0 : i32
    %c0_i32_0 = arith.constant 0 : i32
    return %arg0, %c0_i32 : i32, i32
  }
  func.func @transform_1(%arg0: i32) -> (i32, i32) {
    %c0_i32 = arith.constant 0 : i32
    %c0_i32_0 = arith.constant 0 : i32
    %c0_i32_1 = arith.constant 0 : i32
    return %c0_i32, %c0_i32_0 : i32, i32
  }
  func.func @transform_2(%arg0: i32) -> (i32, i32) {
    %c0_i32 = arith.constant 0 : i32
    %c0_i32_0 = arith.constant 0 : i32
    %c0_i32_1 = arith.constant 0 : i32
    return %c0_i32, %c0_i32_0 : i32, i32
  }
  func.func @transform_3(%arg0: i32) -> (i32, i32) {
    %c0_i32 = arith.constant 0 : i32
    %c0_i32_0 = arith.constant 0 : i32
    %c0_i32_1 = arith.constant 0 : i32
    return %c0_i32, %c0_i32_0 : i32, i32
  }
  func.func @transform_4(%arg0: i32) -> (i32, i32) {
    %c0_i32 = arith.constant 0 : i32
    %c0_i32_0 = arith.constant 0 : i32
    %c0_i32_1 = arith.constant 0 : i32
    return %c0_i32, %c0_i32_0 : i32, i32
  }
  func.func @transform_5(%arg0: i32) -> (i32, i32) {
    %c0_i32 = arith.constant 0 : i32
    %c0_i32_0 = arith.constant 0 : i32
    return %arg0, %c0_i32 : i32, i32
  }
}

</mosaic_0001>

<llo_original>
// kernel: mlp_forward.1
$region0: #{mlp_forward.1}
  #allocation0 [shape = 'u32[]', space=smem, size = 0x4, offset = 0x4, fixed_abs, tag = 'smem constant byte address 0x4 - core index']
  #allocation1 [shape = 'u32[144,128]{1,0:T(1,128)}', space=vmem, size = 0x12000, scoped, tag = 'internal scratch']
  %s0 = inlined_call_operand.vmem [shape: bf16[8,1024], index: 0, kind: input, shape index: {}]
  %s1 = inlined_call_operand.hbm [shape: bf16[1024,128], index: 1, kind: input, shape index: {}]
  %s2 = inlined_call_operand.vmem [shape: f32[1,128], index: 2, kind: input, shape index: {}]
  %s3 = inlined_call_operand.vmem [shape: bf16[128,128], index: 3, kind: input, shape index: {}]
  %s4 = inlined_call_operand.vmem [shape: f32[1,128], index: 4, kind: input, shape index: {}]
  %s5 = inlined_call_operand.vmem [shape: f32[8,128], index: 5, kind: output, shape index: {}]
  %s6 = sld [smem:[#allocation0]]
  $region34: #{mlp_forward.1} parent=0
    _
  %s8 = ssub.s32 1, %s6
  %s9 = scalar_select 0, %s8, %s6
  $region1: #{mlp_forward.1} parent=0
    #allocation2 [shape = 'u8[262144]{0}', space=vmem, size = 0x40000, scoped, tag = 'input window, operand 1, single buffered']
    #allocation3 [shape = 's32[1]{0}', space=sflag, size = 0x4, scoped, tag = 'scoped memory for mlp_forward.1']
    %10 = vsyncpa [#allocation3], 0
    // Predicated region
    $region2: #{mlp_forward.1} parent=1 // pred_check
      _
    $region3: #{mlp_forward.1} parent=1 // pred_check_branch
      %12 = sbr.rel (0) target = $region5
    $region4: #{mlp_forward.1} parent=1 // pred_region
      _
    $region5: #{mlp_forward.1} parent=1 // pred_fallthru
      _
    // Predicated region
    $region6: #{mlp_forward.1} parent=1 // pred_check
      _
    $region7: #{mlp_forward.1} parent=1 // pred_check_branch
      %14 = sbr.rel (0) target = $region9
    $region8: #{mlp_forward.1} parent=1 // pred_region
      %s16 = ssub.s32 8192, 8192
      %17 = vsyncadd [#allocation3], %s16
      %s18 = sshll.u32 [#allocation2], 4
      %s19 = int_to_ptr.vmem [resolvable:$true] %s18
      %24 = dma.hbm_to_vmem [thread:$0]  %s1, 8192, %s19, [#allocation3], 64, 64, 4
    $region9: #{mlp_forward.1} parent=1 // pred_fallthru
      _
    // Predicated region
    $region10: #{mlp_forward.1} parent=1 // pred_check
      _
    $region11: #{mlp_forward.1} parent=1 // pred_check_branch
      %26 = sbr.rel (0) target = $region13
    $region12: #{mlp_forward.1} parent=1 // pred_region
      _
    $region13: #{mlp_forward.1} parent=1 // pred_fallthru
      _
    // Predicated region
    $region14: #{mlp_forward.1} parent=1 // pred_check
      _
    $region15: #{mlp_forward.1} parent=1 // pred_check_branch
      %28 = sbr.rel (0) target = $region17
    $region16: #{mlp_forward.1} parent=1 // pred_region
      _
    $region17: #{mlp_forward.1} parent=1 // pred_fallthru
      _
    // Predicated region
    $region18: #{mlp_forward.1} parent=1 // pred_check
      _
    $region19: #{mlp_forward.1} parent=1 // pred_check_branch
      %30 = sbr.rel (0) target = $region21
    $region20: #{mlp_forward.1} parent=1 // pred_region
      _
    $region21: #{mlp_forward.1} parent=1 // pred_fallthru
      _
    // Predicated region
    $region22: #{mlp_forward.1} parent=1 // pred_check
      _
    $region23: #{mlp_forward.1} parent=1 // pred_check_branch
      %32 = sbr.rel (0) target = $region25
    $region24: #{mlp_forward.1} parent=1 // pred_region
      %33 = dma.done [#allocation3], 8192
    $region25: #{mlp_forward.1} parent=1 // pred_fallthru
      _
    %v35 = vld [vmem:[%s0] sm:$0xff]
    %v36 = vld [vmem:[%s0 + $0x8] sm:$0xff]
    %v37 = vld [vmem:[%s0 + $0x10] sm:$0xff]
    %v38 = vld [vmem:[%s0 + $0x18] sm:$0xff]
    %v39 = vld [vmem:[#allocation2] sm:$0xf]
    %v40 = vld [vmem:[#allocation2 + $0x4] sm:$0xf]
    %v41 = vld [vmem:[#allocation2 + $0x8] sm:$0xf]
    %v42 = vld [vmem:[#allocation2 + $0xc] sm:$0xf]
    %v43 = vld [vmem:[#allocation2 + $0x10] sm:$0xf]
    %v44 = vld [vmem:[#allocation2 + $0x14] sm:$0xf]
    %v45 = vld [vmem:[#allocation2 + $0x18] sm:$0xf]
    %v46 = vld [vmem:[#allocation2 + $0x1c] sm:$0xf]
    %v47 = vld [vmem:[#allocation2 + $0x20] sm:$0xf]
    %v48 = vld [vmem:[#allocation2 + $0x24] sm:$0xf]
    %v49 = vld [vmem:[#allocation2 + $0x28] sm:$0xf]
    %v50 = vld [vmem:[#allocation2 + $0x2c] sm:$0xf]
    %v51 = vld [vmem:[#allocation2 + $0x30] sm:$0xf]
    %v52 = vld [vmem:[#allocation2 + $0x34] sm:$0xf]
    %v53 = vld [vmem:[#allocation2 + $0x38] sm:$0xf]
    %v54 = vld [vmem:[#allocation2 + $0x3c] sm:$0xf]
    %v55 = vld [vmem:[#allocation2 + $0x40] sm:$0xf]
    %v56 = vld [vmem:[#allocation2 + $0x44] sm:$0xf]
    %v57 = vld [vmem:[#allocation2 + $0x48] sm:$0xf]
    %v58 = vld [vmem:[#allocation2 + $0x4c] sm:$0xf]
    %v59 = vld [vmem:[#allocation2 + $0x50] sm:$0xf]
    %v60 = vld [vmem:[#allocation2 + $0x54] sm:$0xf]
    %v61 = vld [vmem:[#allocation2 + $0x58] sm:$0xf]
    %v62 = vld [vmem:[#allocation2 + $0x5c] sm:$0xf]
    %v63 = vld [vmem:[#allocation2 + $0x60] sm:$0xf]
    %v64 = vld [vmem:[#allocation2 + $0x64] sm:$0xf]
    %v65 = vld [vmem:[#allocation2 + $0x68] sm:$0xf]
    %v66 = vld [vmem:[#allocation2 + $0x6c] sm:$0xf]
    %v67 = vld [vmem:[#allocation2 + $0x70] sm:$0xf]
    %v68 = vld [vmem:[#allocation2 + $0x74] sm:$0xf]
    %v69 = vld [vmem:[#allocation2 + $0x78] sm:$0xf]
    %v70 = vld [vmem:[#allocation2 + $0x7c] sm:$0xf]
    %v71 = vld [vmem:[#allocation2 + $0x80] sm:$0xf]
    %v72 = vld [vmem:[#allocation2 + $0x84] sm:$0xf]
    %v73 = vld [vmem:[#allocation2 + $0x88] sm:$0xf]
    %v74 = vld [vmem:[#allocation2 + $0x8c] sm:$0xf]
    %v75 = vld [vmem:[#allocation2 + $0x90] sm:$0xf]
    %v76 = vld [vmem:[#allocation2 + $0x94] sm:$0xf]
    %v77 = vld [vmem:[#allocation2 + $0x98] sm:$0xf]
    %v78 = vld [vmem:[#allocation2 + $0x9c] sm:$0xf]
    %v79 = vld [vmem:[#allocation2 + $0xa0] sm:$0xf]
    %v80 = vld [vmem:[#allocation2 + $0xa4] sm:$0xf]
    %v81 = vld [vmem:[#allocation2 + $0xa8] sm:$0xf]
    %v82 = vld [vmem:[#allocation2 + $0xac] sm:$0xf]
    %v83 = vld [vmem:[#allocation2 + $0xb0] sm:$0xf]
    %v84 = vld [vmem:[#allocation2 + $0xb4] sm:$0xf]
    %v85 = vld [vmem:[#allocation2 + $0xb8] sm:$0xf]
    %v86 = vld [vmem:[#allocation2 + $0xbc] sm:$0xf]
    %v87 = vld [vmem:[#allocation2 + $0xc0] sm:$0xf]
    %v88 = vld [vmem:[#allocation2 + $0xc4] sm:$0xf]
    %v89 = vld [vmem:[#allocation2 + $0xc8] sm:$0xf]
    %v90 = vld [vmem:[#allocation2 + $0xcc] sm:$0xf]
    %v91 = vld [vmem:[#allocation2 + $0xd0] sm:$0xf]
    %v92 = vld [vmem:[#allocation2 + $0xd4] sm:$0xf]
    %v93 = vld [vmem:[#allocation2 + $0xd8] sm:$0xf]
    %v94 = vld [vmem:[#allocation2 + $0xdc] sm:$0xf]
    %v95 = vld [vmem:[#allocation2 + $0xe0] sm:$0xf]
    %v96 = vld [vmem:[#allocation2 + $0xe4] sm:$0xf]
    %v97 = vld [vmem:[#allocation2 + $0xe8] sm:$0xf]
    %v98 = vld [vmem:[#allocation2 + $0xec] sm:$0xf]
    %v99 = vld [vmem:[#allocation2 + $0xf0] sm:$0xf]
    %v100 = vld [vmem:[#allocation2 + $0xf4] sm:$0xf]
    %v101 = vld [vmem:[#allocation2 + $0xf8] sm:$0xf]
    %v102 = vld [vmem:[#allocation2 + $0xfc] sm:$0xf]
    %v103 = vld [vmem:[#allocation2 + $0x100] sm:$0xf]
    %v104 = vld [vmem:[#allocation2 + $0x104] sm:$0xf]
    %v105 = vld [vmem:[#allocation2 + $0x108] sm:$0xf]
    %v106 = vld [vmem:[#allocation2 + $0x10c] sm:$0xf]
    %v107 = vld [vmem:[#allocation2 + $0x110] sm:$0xf]
    %v108 = vld [vmem:[#allocation2 + $0x114] sm:$0xf]
    %v109 = vld [vmem:[#allocation2 + $0x118] sm:$0xf]
    %v110 = vld [vmem:[#allocation2 + $0x11c] sm:$0xf]
    %v111 = vld [vmem:[#allocation2 + $0x120] sm:$0xf]
    %v112 = vld [vmem:[#allocation2 + $0x124] sm:$0xf]
    %v113 = vld [vmem:[#allocation2 + $0x128] sm:$0xf]
    %v114 = vld [vmem:[#allocation2 + $0x12c] sm:$0xf]
    %v115 = vld [vmem:[#allocation2 + $0x130] sm:$0xf]
    %v116 = vld [vmem:[#allocation2 + $0x134] sm:$0xf]
    %v117 = vld [vmem:[#allocation2 + $0x138] sm:$0xf]
    %v118 = vld [vmem:[#allocation2 + $0x13c] sm:$0xf]
    %v119 = vld [vmem:[#allocation2 + $0x140] sm:$0xf]
    %v120 = vld [vmem:[#allocation2 + $0x144] sm:$0xf]
    %v121 = vld [vmem:[#allocation2 + $0x148] sm:$0xf]
    %v122 = vld [vmem:[#allocation2 + $0x14c] sm:$0xf]
    %v123 = vld [vmem:[#allocation2 + $0x150] sm:$0xf]
    %v124 = vld [vmem:[#allocation2 + $0x154] sm:$0xf]
    %v125 = vld [vmem:[#allocation2 + $0x158] sm:$0xf]
    %v126 = vld [vmem:[#allocation2 + $0x15c] sm:$0xf]
    %v127 = vld [vmem:[#allocation2 + $0x160] sm:$0xf]
    %v128 = vld [vmem:[#allocation2 + $0x164] sm:$0xf]
    %v129 = vld [vmem:[#allocation2 + $0x168] sm:$0xf]
    %v130 = vld [vmem:[#allocation2 + $0x16c] sm:$0xf]
    %v131 = vld [vmem:[#allocation2 + $0x170] sm:$0xf]
    %v132 = vld [vmem:[#allocation2 + $0x174] sm:$0xf]
    %v133 = vld [vmem:[#allocation2 + $0x178] sm:$0xf]
    %v134 = vld [vmem:[#allocation2 + $0x17c] sm:$0xf]
    %v135 = vld [vmem:[#allocation2 + $0x180] sm:$0xf]
    %v136 = vld [vmem:[#allocation2 + $0x184] sm:$0xf]
    %v137 = vld [vmem:[#allocation2 + $0x188] sm:$0xf]
    %v138 = vld [vmem:[#allocation2 + $0x18c] sm:$0xf]
    %v139 = vld [vmem:[#allocation2 + $0x190] sm:$0xf]
    %v140 = vld [vmem:[#allocation2 + $0x194] sm:$0xf]
    %v141 = vld [vmem:[#allocation2 + $0x198] sm:$0xf]
    %v142 = vld [vmem:[#allocation2 + $0x19c] sm:$0xf]
    %v143 = vld [vmem:[#allocation2 + $0x1a0] sm:$0xf]
    %v144 = vld [vmem:[#allocation2 + $0x1a4] sm:$0xf]
    %v145 = vld [vmem:[#allocation2 + $0x1a8] sm:$0xf]
    %v146 = vld [vmem:[#allocation2 + $0x1ac] sm:$0xf]
    %v147 = vld [vmem:[#allocation2 + $0x1b0] sm:$0xf]
    %v148 = vld [vmem:[#allocation2 + $0x1b4] sm:$0xf]
    %v149 = vld [vmem:[#allocation2 + $0x1b8] sm:$0xf]
    %v150 = vld [vmem:[#allocation2 + $0x1bc] sm:$0xf]
    %v151 = vld [vmem:[#allocation2 + $0x1c0] sm:$0xf]
    %v152 = vld [vmem:[#allocation2 + $0x1c4] sm:$0xf]
    %v153 = vld [vmem:[#allocation2 + $0x1c8] sm:$0xf]
    %v154 = vld [vmem:[#allocation2 + $0x1cc] sm:$0xf]
    %v155 = vld [vmem:[#allocation2 + $0x1d0] sm:$0xf]
    %v156 = vld [vmem:[#allocation2 + $0x1d4] sm:$0xf]
    %v157 = vld [vmem:[#allocation2 + $0x1d8] sm:$0xf]
    %v158 = vld [vmem:[#allocation2 + $0x1dc] sm:$0xf]
    %v159 = vld [vmem:[#allocation2 + $0x1e0] sm:$0xf]
    %v160 = vld [vmem:[#allocation2 + $0x1e4] sm:$0xf]
    %v161 = vld [vmem:[#allocation2 + $0x1e8] sm:$0xf]
    %v162 = vld [vmem:[#allocation2 + $0x1ec] sm:$0xf]
    %v163 = vld [vmem:[#allocation2 + $0x1f0] sm:$0xf]
    %v164 = vld [vmem:[#allocation2 + $0x1f4] sm:$0xf]
    %v165 = vld [vmem:[#allocation2 + $0x1f8] sm:$0xf]
    %v166 = vld [vmem:[#allocation2 + $0x1fc] sm:$0xf]
    %v167 = vld [vmem:[%s2] sm:$0x1]
    %v169 = vlaneseq
    %v170 = vshrl.u32 %v169, 7
    %v171 = vsub.s32 0, %v170
    %v172 = vrot.slane %v167, %v171
    %v178 = vunpack.c.l.b16 %v35
    %v179 = vunpack.c.h.b16 %v35
    %v180 = vunpack.c.l.b16 %v36
    %v181 = vunpack.c.h.b16 %v36
    %v182 = vunpack.c.l.b16 %v37
    %v183 = vunpack.c.h.b16 %v37
    %v184 = vunpack.c.l.b16 %v38
    %v185 = vunpack.c.h.b16 %v38
    %v186 = vpack.c.b16 %v178, %v178
    %v187 = vpack.c.b16 %v179, %v179
    %v188 = vpack.c.b16 %v180, %v180
    %v189 = vpack.c.b16 %v181, %v181
    %v190 = vpack.c.b16 %v182, %v182
    %v191 = vpack.c.b16 %v183, %v183
    %v192 = vpack.c.b16 %v184, %v184
    %v193 = vpack.c.b16 %v185, %v185
    %v330 = vunpack.c.l.b16 %v39
    %v331 = vunpack.c.l.b16 %v40
    %v332 = vunpack.c.l.b16 %v41
    %v333 = vunpack.c.l.b16 %v42
    %v334 = vunpack.c.l.b16 %v43
    %v335 = vunpack.c.l.b16 %v44
    %v336 = vunpack.c.l.b16 %v45
    %v337 = vunpack.c.l.b16 %v46
    %v338 = vunpack.c.l.b16 %v47
    %v339 = vunpack.c.l.b16 %v48
    %v340 = vunpack.c.l.b16 %v49
    %v341 = vunpack.c.l.b16 %v50
    %v342 = vunpack.c.l.b16 %v51
    %v343 = vunpack.c.l.b16 %v52
    %v344 = vunpack.c.l.b16 %v53
    %v345 = vunpack.c.l.b16 %v54
    %v346 = vunpack.c.l.b16 %v55
    %v347 = vunpack.c.l.b16 %v56
    %v348 = vunpack.c.l.b16 %v57
    %v349 = vunpack.c.l.b16 %v58
    %v350 = vunpack.c.l.b16 %v59
    %v351 = vunpack.c.l.b16 %v60
    %v352 = vunpack.c.l.b16 %v61
    %v353 = vunpack.c.l.b16 %v62
    %v354 = vunpack.c.l.b16 %v63
    %v355 = vunpack.c.l.b16 %v64
    %v356 = vunpack.c.l.b16 %v65
    %v357 = vunpack.c.l.b16 %v66
    %v358 = vunpack.c.l.b16 %v67
    %v359 = vunpack.c.l.b16 %v68
    %v360 = vunpack.c.l.b16 %v69
    %v361 = vunpack.c.l.b16 %v70
    %v362 = vunpack.c.l.b16 %v71
    %v363 = vunpack.c.l.b16 %v72
    %v364 = vunpack.c.l.b16 %v73
    %v365 = vunpack.c.l.b16 %v74
    %v366 = vunpack.c.l.b16 %v75
    %v367 = vunpack.c.l.b16 %v76
    %v368 = vunpack.c.l.b16 %v77
    %v369 = vunpack.c.l.b16 %v78
    %v370 = vunpack.c.l.b16 %v79
    %v371 = vunpack.c.l.b16 %v80
    %v372 = vunpack.c.l.b16 %v81
    %v373 = vunpack.c.l.b16 %v82
    %v374 = vunpack.c.l.b16 %v83
    %v375 = vunpack.c.l.b16 %v84
    %v376 = vunpack.c.l.b16 %v85
    %v377 = vunpack.c.l.b16 %v86
    %v378 = vunpack.c.l.b16 %v87
    %v379 = vunpack.c.l.b16 %v88
    %v380 = vunpack.c.l.b16 %v89
    %v381 = vunpack.c.l.b16 %v90
    %v382 = vunpack.c.l.b16 %v91
    %v383 = vunpack.c.l.b16 %v92
    %v384 = vunpack.c.l.b16 %v93
    %v385 = vunpack.c.l.b16 %v94
    %v386 = vunpack.c.l.b16 %v95
    %v387 = vunpack.c.l.b16 %v96
    %v388 = vunpack.c.l.b16 %v97
    %v389 = vunpack.c.l.b16 %v98
    %v390 = vunpack.c.l.b16 %v99
    %v391 = vunpack.c.l.b16 %v100
    %v392 = vunpack.c.l.b16 %v101
    %v393 = vunpack.c.l.b16 %v102
    %v394 = vunpack.c.l.b16 %v103
    %v395 = vunpack.c.l.b16 %v104
    %v396 = vunpack.c.l.b16 %v105
    %v397 = vunpack.c.l.b16 %v106
    %v398 = vunpack.c.l.b16 %v107
    %v399 = vunpack.c.l.b16 %v108
    %v400 = vunpack.c.l.b16 %v109
    %v401 = vunpack.c.l.b16 %v110
    %v402 = vunpack.c.l.b16 %v111
    %v403 = vunpack.c.l.b16 %v112
    %v404 = vunpack.c.l.b16 %v113
    %v405 = vunpack.c.l.b16 %v114
    %v406 = vunpack.c.l.b16 %v115
    %v407 = vunpack.c.l.b16 %v116
    %v408 = vunpack.c.l.b16 %v117
    %v409 = vunpack.c.l.b16 %v118
    %v410 = vunpack.c.l.b16 %v119
    %v411 = vunpack.c.l.b16 %v120
    %v412 = vunpack.c.l.b16 %v121
    %v413 = vunpack.c.l.b16 %v122
    %v414 = vunpack.c.l.b16 %v123
    %v415 = vunpack.c.l.b16 %v124
    %v416 = vunpack.c.l.b16 %v125
    %v417 = vunpack.c.l.b16 %v126
    %v418 = vunpack.c.l.b16 %v127
    %v419 = vunpack.c.l.b16 %v128
    %v420 = vunpack.c.l.b16 %v129
    %v421 = vunpack.c.l.b16 %v130
    %v422 = vunpack.c.l.b16 %v131
    %v423 = vunpack.c.l.b16 %v132
    %v424 = vunpack.c.l.b16 %v133
    %v425 = vunpack.c.l.b16 %v134
    %v426 = vunpack.c.l.b16 %v135
    %v427 = vunpack.c.l.b16 %v136
    %v428 = vunpack.c.l.b16 %v137
    %v429 = vunpack.c.l.b16 %v138
    %v430 = vunpack.c.l.b16 %v139
    %v431 = vunpack.c.l.b16 %v140
    %v432 = vunpack.c.l.b16 %v141
    %v433 = vunpack.c.l.b16 %v142
    %v434 = vunpack.c.l.b16 %v143
    %v435 = vunpack.c.l.b16 %v144
    %v436 = vunpack.c.l.b16 %v145
    %v437 = vunpack.c.l.b16 %v146
    %v438 = vunpack.c.l.b16 %v147
    %v439 = vunpack.c.l.b16 %v148
    %v440 = vunpack.c.l.b16 %v149
    %v441 = vunpack.c.l.b16 %v150
    %v442 = vunpack.c.l.b16 %v151
    %v443 = vunpack.c.l.b16 %v152
    %v444 = vunpack.c.l.b16 %v153
    %v445 = vunpack.c.l.b16 %v154
    %v446 = vunpack.c.l.b16 %v155
    %v447 = vunpack.c.l.b16 %v156
    %v448 = vunpack.c.l.b16 %v157
    %v449 = vunpack.c.l.b16 %v158
    %v450 = vunpack.c.l.b16 %v159
    %v451 = vunpack.c.l.b16 %v160
    %v452 = vunpack.c.l.b16 %v161
    %v453 = vunpack.c.l.b16 %v162
    %v454 = vunpack.c.l.b16 %v163
    %v455 = vunpack.c.l.b16 %v164
    %v456 = vunpack.c.l.b16 %v165
    %v457 = vunpack.c.l.b16 %v166
    %v458 = vpack.c.b16 %v331, %v330
    %v459 = vpack.c.b16 %v333, %v332
    %v460 = vpack.c.b16 %v335, %v334
    %v461 = vpack.c.b16 %v337, %v336
    %v462 = vpack.c.b16 %v339, %v338
    %v463 = vpack.c.b16 %v341, %v340
    %v464 = vpack.c.b16 %v343, %v342
    %v465 = vpack.c.b16 %v345, %v344
    %v466 = vpack.c.b16 %v347, %v346
    %v467 = vpack.c.b16 %v349, %v348
    %v468 = vpack.c.b16 %v351, %v350
    %v469 = vpack.c.b16 %v353, %v352
    %v470 = vpack.c.b16 %v355, %v354
    %v471 = vpack.c.b16 %v357, %v356
    %v472 = vpack.c.b16 %v359, %v358
    %v473 = vpack.c.b16 %v361, %v360
    %v474 = vpack.c.b16 %v363, %v362
    %v475 = vpack.c.b16 %v365, %v364
    %v476 = vpack.c.b16 %v367, %v366
    %v477 = vpack.c.b16 %v369, %v368
    %v478 = vpack.c.b16 %v371, %v370
    %v479 = vpack.c.b16 %v373, %v372
    %v480 = vpack.c.b16 %v375, %v374
    %v481 = vpack.c.b16 %v377, %v376
    %v482 = vpack.c.b16 %v379, %v378
    %v483 = vpack.c.b16 %v381, %v380
    %v484 = vpack.c.b16 %v383, %v382
    %v485 = vpack.c.b16 %v385, %v384
    %v486 = vpack.c.b16 %v387, %v386
    %v487 = vpack.c.b16 %v389, %v388
    %v488 = vpack.c.b16 %v391, %v390
    %v489 = vpack.c.b16 %v393, %v392
    %v490 = vpack.c.b16 %v395, %v394
    %v491 = vpack.c.b16 %v397, %v396
    %v492 = vpack.c.b16 %v399, %v398
    %v493 = vpack.c.b16 %v401, %v400
    %v494 = vpack.c.b16 %v403, %v402
    %v495 = vpack.c.b16 %v405, %v404
    %v496 = vpack.c.b16 %v407, %v406
    %v497 = vpack.c.b16 %v409, %v408
    %v498 = vpack.c.b16 %v411, %v410
    %v499 = vpack.c.b16 %v413, %v412
    %v500 = vpack.c.b16 %v415, %v414
    %v501 = vpack.c.b16 %v417, %v416
    %v502 = vpack.c.b16 %v419, %v418
    %v503 = vpack.c.b16 %v421, %v420
    %v504 = vpack.c.b16 %v423, %v422
    %v505 = vpack.c.b16 %v425, %v424
    %v506 = vpack.c.b16 %v427, %v426
    %v507 = vpack.c.b16 %v429, %v428
    %v508 = vpack.c.b16 %v431, %v430
    %v509 = vpack.c.b16 %v433, %v432
    %v510 = vpack.c.b16 %v435, %v434
    %v511 = vpack.c.b16 %v437, %v436
    %v512 = vpack.c.b16 %v439, %v438
    %v513 = vpack.c.b16 %v441, %v440
    %v514 = vpack.c.b16 %v443, %v442
    %v515 = vpack.c.b16 %v445, %v444
    %v516 = vpack.c.b16 %v447, %v446
    %v517 = vpack.c.b16 %v449, %v448
    %v518 = vpack.c.b16 %v451, %v450
    %v519 = vpack.c.b16 %v453, %v452
    %v520 = vpack.c.b16 %v455, %v454
    %v521 = vpack.c.b16 %v457, %v456
    %586 = vmatprep.subr.bf16.mxu0 0
    %587 = vmatpush1.bf16.msra.mxu0 %v465
    %588 = vmatprep.subr.bf16.mxu0 0
    %589 = vmatpush1.bf16.msra.mxu0 %v464
    %590 = vmatprep.subr.bf16.mxu0 0
    %591 = vmatpush1.bf16.msra.mxu0 %v463
    %592 = vmatprep.subr.bf16.mxu0 0
    %593 = vmatpush1.bf16.msra.mxu0 %v462
    %594 = vmatprep.subr.bf16.mxu0 0
    %595 = vmatpush1.bf16.msra.mxu0 %v461
    %596 = vmatprep.subr.bf16.mxu0 0
    %597 = vmatpush1.bf16.msra.mxu0 %v460
    %598 = vmatprep.subr.bf16.mxu0 0
    %599 = vmatpush1.bf16.msra.mxu0 %v459
    %600 = vmatprep.subr.bf16.mxu0 0
    %601 = vmatpush1.bf16.msra.mxu0 %v458
    %602 = vmatprep.subr.bf16.mxu0 0
    %603 = vmatpush2.bf16.msra.mxu0 %v473
    %604 = vmatprep.subr.bf16.mxu0 0
    %605 = vmatpush2.bf16.msra.mxu0 %v472
    %606 = vmatprep.subr.bf16.mxu0 0
    %607 = vmatpush2.bf16.msra.mxu0 %v471
    %608 = vmatprep.subr.bf16.mxu0 0
    %609 = vmatpush2.bf16.msra.mxu0 %v470
    %610 = vmatprep.subr.bf16.mxu0 0
    %611 = vmatpush2.bf16.msra.mxu0 %v469
    %612 = vmatprep.subr.bf16.mxu0 0
    %613 = vmatpush2.bf16.msra.mxu0 %v468
    %614 = vmatprep.subr.bf16.mxu0 0
    %615 = vmatpush2.bf16.msra.mxu0 %v467
    %616 = vmatprep.subr.bf16.mxu0 0
    %617 = vmatpush2.bf16.msra.mxu0 %v466
    %618 = vmatprep.mubr.bf16.mxu0 %v187
    %619 = vmatmul.mubr.bf16.gmra.mxu0 %v186
    %v620 = vpop.f32.mrf.mxu0
    %v621 = vadd.f32 %v172, %v620
    %v622 = vpop.f32.mrf.mxu0
    %v623 = vpop.f32.mrf.mxu0
    %v624 = vpop.f32.mrf.mxu0
    %625 = vdwg.mxu0
    %626 = vmatprep.subr.bf16.mxu0 0
    %627 = vmatpush1.bf16.msra.mxu0 %v481
    %628 = vmatprep.subr.bf16.mxu0 0
    %629 = vmatpush1.bf16.msra.mxu0 %v480
    %630 = vmatprep.subr.bf16.mxu0 0
    %631 = vmatpush1.bf16.msra.mxu0 %v479
    %632 = vmatprep.subr.bf16.mxu0 0
    %633 = vmatpush1.bf16.msra.mxu0 %v478
    %634 = vmatprep.subr.bf16.mxu0 0
    %635 = vmatpush1.bf16.msra.mxu0 %v477
    %636 = vmatprep.subr.bf16.mxu0 0
    %637 = vmatpush1.bf16.msra.mxu0 %v476
    %638 = vmatprep.subr.bf16.mxu0 0
    %639 = vmatpush1.bf16.msra.mxu0 %v475
    %640 = vmatprep.subr.bf16.mxu0 0
    %641 = vmatpush1.bf16.msra.mxu0 %v474
    %642 = vmatprep.subr.bf16.mxu0 0
    %643 = vmatpush2.bf16.msra.mxu0 %v489
    %644 = vmatprep.subr.bf16.mxu0 0
    %645 = vmatpush2.bf16.msra.mxu0 %v488
    %646 = vmatprep.subr.bf16.mxu0 0
    %647 = vmatpush2.bf16.msra.mxu0 %v487
    %648 = vmatprep.subr.bf16.mxu0 0
    %649 = vmatpush2.bf16.msra.mxu0 %v486
    %650 = vmatprep.subr.bf16.mxu0 0
    %651 = vmatpush2.bf16.msra.mxu0 %v485
    %652 = vmatprep.subr.bf16.mxu0 0
    %653 = vmatpush2.bf16.msra.mxu0 %v484
    %654 = vmatprep.subr.bf16.mxu0 0
    %655 = vmatpush2.bf16.msra.mxu0 %v483
    %656 = vmatprep.subr.bf16.mxu0 0
    %657 = vmatpush2.bf16.msra.mxu0 %v482
    %658 = vmatprep.mubr.bf16.mxu0 %v189
    %659 = vmatmul.mubr.bf16.gmra.mxu0 %v188
    %v660 = vpop.f32.mrf.mxu0
    %v661 = vadd.f32 %v621, %v660
    %v662 = vpop.f32.mrf.mxu0
    %v663 = vpop.f32.mrf.mxu0
    %v664 = vpop.f32.mrf.mxu0
    %665 = vdwg.mxu0
    %666 = vmatprep.subr.bf16.mxu0 0
    %667 = vmatpush1.bf16.msra.mxu0 %v497
    %668 = vmatprep.subr.bf16.mxu0 0
    %669 = vmatpush1.bf16.msra.mxu0 %v496
    %670 = vmatprep.subr.bf16.mxu0 0
    %671 = vmatpush1.bf16.msra.mxu0 %v495
    %672 = vmatprep.subr.bf16.mxu0 0
    %673 = vmatpush1.bf16.msra.mxu0 %v494
    %674 = vmatprep.subr.bf16.mxu0 0
    %675 = vmatpush1.bf16.msra.mxu0 %v493
    %676 = vmatprep.subr.bf16.mxu0 0
    %677 = vmatpush1.bf16.msra.mxu0 %v492
    %678 = vmatprep.subr.bf16.mxu0 0
    %679 = vmatpush1.bf16.msra.mxu0 %v491
    %680 = vmatprep.subr.bf16.mxu0 0
    %681 = vmatpush1.bf16.msra.mxu0 %v490
    %682 = vmatprep.subr.bf16.mxu0 0
    %683 = vmatpush2.bf16.msra.mxu0 %v505
    %684 = vmatprep.subr.bf16.mxu0 0
    %685 = vmatpush2.bf16.msra.mxu0 %v504
    %686 = vmatprep.subr.bf16.mxu0 0
    %687 = vmatpush2.bf16.msra.mxu0 %v503
    %688 = vmatprep.subr.bf16.mxu0 0
    %689 = vmatpush2.bf16.msra.mxu0 %v502
    %690 = vmatprep.subr.bf16.mxu0 0
    %691 = vmatpush2.bf16.msra.mxu0 %v501
    %692 = vmatprep.subr.bf16.mxu0 0
    %693 = vmatpush2.bf16.msra.mxu0 %v500
    %694 = vmatprep.subr.bf16.mxu0 0
    %695 = vmatpush2.bf16.msra.mxu0 %v499
    %696 = vmatprep.subr.bf16.mxu0 0
    %697 = vmatpush2.bf16.msra.mxu0 %v498
    %698 = vmatprep.mubr.bf16.mxu0 %v191
    %699 = vmatmul.mubr.bf16.gmra.mxu0 %v190
    %v700 = vpop.f32.mrf.mxu0
    %v701 = vadd.f32 %v661, %v700
    %v702 = vpop.f32.mrf.mxu0
    %v703 = vpop.f32.mrf.mxu0
    %v704 = vpop.f32.mrf.mxu0
    %705 = vdwg.mxu0
    %706 = vmatprep.subr.bf16.mxu0 0
    %707 = vmatpush1.bf16.msra.mxu0 %v513
    %708 = vmatprep.subr.bf16.mxu0 0
    %709 = vmatpush1.bf16.msra.mxu0 %v512
    %710 = vmatprep.subr.bf16.mxu0 0
    %711 = vmatpush1.bf16.msra.mxu0 %v511
    %712 = vmatprep.subr.bf16.mxu0 0
    %713 = vmatpush1.bf16.msra.mxu0 %v510
    %714 = vmatprep.subr.bf16.mxu0 0
    %715 = vmatpush1.bf16.msra.mxu0 %v509
    %716 = vmatprep.subr.bf16.mxu0 0
    %717 = vmatpush1.bf16.msra.mxu0 %v508
    %718 = vmatprep.subr.bf16.mxu0 0
    %719 = vmatpush1.bf16.msra.mxu0 %v507
    %720 = vmatprep.subr.bf16.mxu0 0
    %721 = vmatpush1.bf16.msra.mxu0 %v506
    %722 = vmatprep.subr.bf16.mxu0 0
    %723 = vmatpush2.bf16.msra.mxu0 %v521
    %724 = vmatprep.subr.bf16.mxu0 0
    %725 = vmatpush2.bf16.msra.mxu0 %v520
    %726 = vmatprep.subr.bf16.mxu0 0
    %727 = vmatpush2.bf16.msra.mxu0 %v519
    %728 = vmatprep.subr.bf16.mxu0 0
    %729 = vmatpush2.bf16.msra.mxu0 %v518
    %730 = vmatprep.subr.bf16.mxu0 0
    %731 = vmatpush2.bf16.msra.mxu0 %v517
    %732 = vmatprep.subr.bf16.mxu0 0
    %733 = vmatpush2.bf16.msra.mxu0 %v516
    %734 = vmatprep.subr.bf16.mxu0 0
    %735 = vmatpush2.bf16.msra.mxu0 %v515
    %736 = vmatprep.subr.bf16.mxu0 0
    %737 = vmatpush2.bf16.msra.mxu0 %v514
    %738 = vmatprep.mubr.bf16.mxu0 %v193
    %739 = vmatmul.mubr.bf16.gmra.mxu0 %v192
    %v740 = vpop.f32.mrf.mxu0
    %v741 = vadd.f32 %v701, %v740
    %v742 = vpop.f32.mrf.mxu0
    %v743 = vpop.f32.mrf.mxu0
    %v744 = vpop.f32.mrf.mxu0
    %745 = vdwg.mxu0
    %v746 = vmax.f32 %v741, 0.0
    %v747 = vpack.c.bf16 %v746, %v746
    %v748 = vld [vmem:[%s3] sm:$0xf]
    %v749 = vld [vmem:[%s3 + $0x4] sm:$0xf]
    %v750 = vld [vmem:[%s3 + $0x8] sm:$0xf]
    %v751 = vld [vmem:[%s3 + $0xc] sm:$0xf]
    %v752 = vld [vmem:[%s3 + $0x10] sm:$0xf]
    %v753 = vld [vmem:[%s3 + $0x14] sm:$0xf]
    %v754 = vld [vmem:[%s3 + $0x18] sm:$0xf]
    %v755 = vld [vmem:[%s3 + $0x1c] sm:$0xf]
    %v756 = vld [vmem:[%s3 + $0x20] sm:$0xf]
    %v757 = vld [vmem:[%s3 + $0x24] sm:$0xf]
    %v758 = vld [vmem:[%s3 + $0x28] sm:$0xf]
    %v759 = vld [vmem:[%s3 + $0x2c] sm:$0xf]
    %v760 = vld [vmem:[%s3 + $0x30] sm:$0xf]
    %v761 = vld [vmem:[%s3 + $0x34] sm:$0xf]
    %v762 = vld [vmem:[%s3 + $0x38] sm:$0xf]
    %v763 = vld [vmem:[%s3 + $0x3c] sm:$0xf]
    %v764 = vld [vmem:[%s4] sm:$0x1]
    %v766 = vlaneseq
    %v767 = vshrl.u32 %v766, 7
    %v768 = vsub.s32 0, %v767
    %v769 = vrot.slane %v764, %v768
    %v787 = vunpack.c.l.b16 %v748
    %v788 = vunpack.c.l.b16 %v749
    %v789 = vunpack.c.l.b16 %v750
    %v790 = vunpack.c.l.b16 %v751
    %v791 = vunpack.c.l.b16 %v752
    %v792 = vunpack.c.l.b16 %v753
    %v793 = vunpack.c.l.b16 %v754
    %v794 = vunpack.c.l.b16 %v755
    %v795 = vunpack.c.l.b16 %v756
    %v796 = vunpack.c.l.b16 %v757
    %v797 = vunpack.c.l.b16 %v758
    %v798 = vunpack.c.l.b16 %v759
    %v799 = vunpack.c.l.b16 %v760
    %v800 = vunpack.c.l.b16 %v761
    %v801 = vunpack.c.l.b16 %v762
    %v802 = vunpack.c.l.b16 %v763
    %v803 = vpack.c.b16 %v788, %v787
    %v804 = vpack.c.b16 %v790, %v789
    %v805 = vpack.c.b16 %v792, %v791
    %v806 = vpack.c.b16 %v794, %v793
    %v807 = vpack.c.b16 %v796, %v795
    %v808 = vpack.c.b16 %v798, %v797
    %v809 = vpack.c.b16 %v800, %v799
    %v810 = vpack.c.b16 %v802, %v801
    %819 = vmatprep.subr.bf16.mxu0 0
    %820 = vmatpush1.bf16.msra.mxu0 %v810
    %821 = vmatprep.subr.bf16.mxu0 0
    %822 = vmatpush1.bf16.msra.mxu0 %v809
    %823 = vmatprep.subr.bf16.mxu0 0
    %824 = vmatpush1.bf16.msra.mxu0 %v808
    %825 = vmatprep.subr.bf16.mxu0 0
    %826 = vmatpush1.bf16.msra.mxu0 %v807
    %827 = vmatprep.subr.bf16.mxu0 0
    %828 = vmatpush1.bf16.msra.mxu0 %v806
    %829 = vmatprep.subr.bf16.mxu0 0
    %830 = vmatpush1.bf16.msra.mxu0 %v805
    %831 = vmatprep.subr.bf16.mxu0 0
    %832 = vmatpush1.bf16.msra.mxu0 %v804
    %833 = vmatprep.subr.bf16.mxu0 0
    %834 = vmatpush1.bf16.msra.mxu0 %v803
    %835 = vmatprep.subr.bf16.mxu0 0
    %836 = vmatpush2.bf16.msra.mxu0 0
    %837 = vmatprep.subr.bf16.mxu0 0
    %838 = vmatpush2.bf16.msra.mxu0 0
    %839 = vmatprep.subr.bf16.mxu0 0
    %840 = vmatpush2.bf16.msra.mxu0 0
    %841 = vmatprep.subr.bf16.mxu0 0
    %842 = vmatpush2.bf16.msra.mxu0 0
    %843 = vmatprep.subr.bf16.mxu0 0
    %844 = vmatpush2.bf16.msra.mxu0 0
    %845 = vmatprep.subr.bf16.mxu0 0
    %846 = vmatpush2.bf16.msra.mxu0 0
    %847 = vmatprep.subr.bf16.mxu0 0
    %848 = vmatpush2.bf16.msra.mxu0 0
    %849 = vmatprep.subr.bf16.mxu0 0
    %850 = vmatpush2.bf16.msra.mxu0 0
    %851 = vmatprep.mubr.bf16.mxu0 0
    %852 = vmatmul.mubr.bf16.gmra.mxu0 %v747
    %v853 = vpop.f32.mrf.mxu0
    %v854 = vadd.f32 %v769, %v853
    %v855 = vpop.f32.mrf.mxu0
    %v856 = vpop.f32.mrf.mxu0
    %v857 = vpop.f32.mrf.mxu0
    %858 = vdwg.mxu0
    %859 = vmax.xlane.f32.xlu0 %v854
    %v860 = vpop.xlane.xlu0 %859
    %v861 = vsub.f32 %v854, %v860
    %v862 = vmul.f32 %v861, 1.442695
    %v863 = vpow.pop %v862
    %864 = vadd.xlane.f32.xlu0 %v863
    %v865 = vpop.xlane.xlu0 %864
    %v866 = vrcp.pop %v865
    %v867 = vmul.f32 %v863, %v866
    %868 = vst [vmem:[%s5] sm:$0xff] %v867
    // Predicated region
    $region26: #{mlp_forward.1} parent=1 // pred_check
      _
    $region27: #{mlp_forward.1} parent=1 // pred_check_branch
      %870 = sbr.rel (0) target = $region29
    $region28: #{mlp_forward.1} parent=1 // pred_region
      _
    $region29: #{mlp_forward.1} parent=1 // pred_fallthru
      _
    // Predicated region
    $region30: #{mlp_forward.1} parent=1 // pred_check
      _
    $region31: #{mlp_forward.1} parent=1 // pred_check_branch
      %872 = sbr.rel (0) target = $region33
    $region32: #{mlp_forward.1} parent=1 // pred_region
      _
    $region33: #{mlp_forward.1} parent=1 // pred_fallthru
      _
    %873 = vsyncpa [#allocation3], 1

</llo_original>
